<compile_context>
chip_gen: v7x
topology: tpu7x:2x2x1
jax: 0.10.0
libtpu: 0.0.40
codegen_flags: <defaults>
</compile_context>

<pallas_src>
import math

import jax
import jax.numpy as jnp
from jax.experimental import pallas as pl
from jax.experimental.pallas import tpu as pltpu


LANE = 128          # MXU / vreg lane width
SUBLANE_BF16 = 16   # bf16 sublane packing


def _round_up(x, m):
    return ((x + m - 1) // m) * m


def mlp_kernel(x_ref, w1_ref, w2_ref, w3_ref, o_ref):
    # x:  (TILE_B, D_in_p)  bf16
    # w1: (D_in_p, H1_p)    bf16   (pre-transposed + zero padded)
    # w2: (H1_p,  H2_p)     bf16
    # w3: (H2_p,  C_p)      bf16
    # o:  (TILE_B, C_p)     f32
    x = x_ref[...]
    h1 = jnp.dot(x, w1_ref[...], preferred_element_type=jnp.float32)
    h1 = jnp.maximum(h1, 0.0).astype(jnp.bfloat16)            # ReLU
    h2 = jnp.dot(h1, w2_ref[...], preferred_element_type=jnp.float32)
    h2 = jnp.maximum(h2, 0.0).astype(jnp.bfloat16)            # ReLU
    out = jnp.dot(h2, w3_ref[...], preferred_element_type=jnp.float32)
    o_ref[...] = out.astype(o_ref.dtype)


def mlp_forward(x_nchw, w1, w2, w3, *, tile_b=256):
    """out = relu(relu(x @ w1.T) @ w2.T) @ w3.T, with x flattened NCHW -> (B, C*H*W)."""
    B = x_nchw.shape[0]
    d_in = int(math.prod(x_nchw.shape[1:]))
    x2d = x_nchw.reshape(B, d_in)                  # == torch x.view(-1, input_size)

    h1, _ = w1.shape
    h2 = w2.shape[0]
    c = w3.shape[0]

    # Pad every matmul dim to a multiple of 128 lanes.
    d_in_p = _round_up(d_in, LANE)
    h1_p = _round_up(h1, LANE)
    h2_p = _round_up(h2, LANE)
    c_p = _round_up(c, LANE)

    # Batch tile: multiple of 16 (bf16 sublane pack), capped at `tile_b`.
    tile_b = min(tile_b, _round_up(B, SUBLANE_BF16))
    tile_b = _round_up(tile_b, SUBLANE_BF16)
    b_pad = _round_up(B, tile_b)

    def pad2(a, rows, cols):
        return jnp.pad(a, ((0, rows - a.shape[0]), (0, cols - a.shape[1])))

    # Pre-transpose (wrapper-side layout plumbing) to (in, out), zero-pad, bf16.
    wt1 = pad2(w1, h1_p, d_in_p).T.astype(jnp.bfloat16)   # (d_in_p, h1_p)
    wt2 = pad2(w2, h2_p, h1_p).T.astype(jnp.bfloat16)     # (h1_p,  h2_p)
    wt3 = pad2(w3, c_p, h2_p).T.astype(jnp.bfloat16)      # (h2_p,  c_p)
    xp = pad2(x2d, b_pad, d_in_p).astype(jnp.bfloat16)    # (b_pad, d_in_p)

    grid = (pl.cdiv(b_pad, tile_b),)

    # Advisory cost estimate for XLA scheduling.
    flops = 2 * b_pad * (d_in_p * h1_p + h1_p * h2_p + h2_p * c_p)
    bytes_accessed = 2 * (xp.size + wt1.size + wt2.size + wt3.size) + 4 * b_pad * c_p

    # VMEM budget: double-buffered x tile + resident weights + double-buffered
    # output tile (+ margin). Never below the default scoped limit, never above
    # v7x's 64 MiB physical VMEM.
    vmem_need = (2 * tile_b * d_in_p * 2
                 + 2 * (wt1.size + wt2.size + wt3.size)
                 + 2 * tile_b * c_p * 4
                 + (1 << 20))
    vmem_limit = min(max(vmem_need, 32 << 20), 64 << 20)

    out_padded = pl.pallas_call(
        mlp_kernel,
        out_shape=jax.ShapeDtypeStruct((b_pad, c_p), jnp.float32),
        grid_spec=pltpu.PrefetchScalarGridSpec(
            num_scalar_prefetch=0,
            grid=grid,
            in_specs=[
                pl.BlockSpec((tile_b, d_in_p), lambda i: (i, 0)),   # x: tiled over batch
                pl.BlockSpec((d_in_p, h1_p), lambda i: (0, 0)),     # weights: VMEM-resident
                pl.BlockSpec((h1_p, h2_p), lambda i: (0, 0)),
                pl.BlockSpec((h2_p, c_p), lambda i: (0, 0)),
            ],
            out_specs=pl.BlockSpec((tile_b, c_p), lambda i: (i, 0)),
        ),
        compiler_params=pltpu.CompilerParams(
            dimension_semantics=("parallel",),
            vmem_limit_bytes=int(vmem_limit),
        ),
        cost_estimate=pl.CostEstimate(
            flops=int(flops), transcendentals=0, bytes_accessed=int(bytes_accessed)),
    )(xp, wt1, wt2, wt3)

    return out_padded[:B, :c]


def kaiming_uniform(key, fan_out, fan_in, dtype=jnp.float32):
    # Deterministic synthetic weights (kaiming-style bound, gain=sqrt(2)).
    bound = jnp.sqrt(6.0 / fan_in)
    return jax.random.uniform(key, (fan_out, fan_in), dtype, -bound, bound)


if __name__ == "__main__":
    # Shapes consistent with the module: input_shape=(C,H,W)=(4,16,16),
    # hidden_sizes=(32, 32), num_classes=16, batch=2.
    B, C, H, W = 2, 4, 16, 16
    hidden1, hidden2, num_classes = 32, 32, 16
    d_in = C * H * W

    key = jax.random.PRNGKey(0)
    kx, k1, k2, k3 = jax.random.split(key, 4)

    x = jax.random.normal(kx, (B, C, H, W), jnp.float32)
    w1 = kaiming_uniform(k1, hidden1, d_in)          # Linear(d_in -> hidden1), bias=False
    w2 = kaiming_uniform(k2, hidden2, hidden1)       # Linear(hidden1 -> hidden2), bias=False
    w3 = kaiming_uniform(k3, num_classes, hidden2)   # Linear(hidden2 -> num_classes), bias=False

    out = mlp_forward(x, w1, w2, w3)
    out = jax.block_until_ready(out)
    assert out.shape == (B, num_classes)

    # Reference with matching precision (bf16 operands, f32 accumulation).
    x2d = x.reshape(B, d_in).astype(jnp.bfloat16)
    ref = jnp.dot(x2d, w1.T.astype(jnp.bfloat16), preferred_element_type=jnp.float32)
    ref = jnp.maximum(ref, 0.0).astype(jnp.bfloat16)
    ref = jnp.dot(ref, w2.T.astype(jnp.bfloat16), preferred_element_type=jnp.float32)
    ref = jnp.maximum(ref, 0.0).astype(jnp.bfloat16)
    ref = jnp.dot(ref, w3.T.astype(jnp.bfloat16), preferred_element_type=jnp.float32)
    assert jnp.allclose(out, ref, atol=1e-2, rtol=1e-2), (
        f"max abs err {jnp.max(jnp.abs(out - ref))}")

    # Sanity-check against the full-f32 reference with a looser tolerance.
    x32 = x.reshape(B, d_in)
    ref32 = jnp.maximum(x32 @ w1.T, 0.0)
    ref32 = jnp.maximum(ref32 @ w2.T, 0.0)
    ref32 = ref32 @ w3.T
    assert jnp.allclose(out, ref32, atol=5e-2, rtol=5e-2), (
        f"max abs err vs f32 ref {jnp.max(jnp.abs(out - ref32))}")

    print("KERNEL_OK")
</pallas_src>

<mosaic_0001>
module attributes {stable_mosaic.version = 11 : i64} {
  func.func @mlp_kernel(%arg0: i32, %arg1: memref<16x1024xbf16, #tpu.memory_space<vmem>>, %arg2: memref<1024x128xbf16, #tpu.memory_space<vmem>>, %arg3: memref<128x128xbf16, #tpu.memory_space<vmem>>, %arg4: memref<128x128xbf16, #tpu.memory_space<vmem>>, %arg5: memref<16x128xf32, #tpu.memory_space<vmem>>) attributes {dimension_semantics = [#tpu.dimension_semantics<parallel>], iteration_bounds = array<i64: 1>, scalar_prefetch = 0 : i64, scratch_operands = 0 : i64, tpu.core_type = #tpu.core_type<tc>, window_params = [{transform_indices = @transform_0, window_bounds = array<i64: 16, 1024>}, {pipeline_mode = #tpu.pipeline_mode<synchronous>, transform_indices = @transform_1, window_bounds = array<i64: 1024, 128>}, {pipeline_mode = #tpu.pipeline_mode<synchronous>, transform_indices = @transform_2, window_bounds = array<i64: 128, 128>}, {pipeline_mode = #tpu.pipeline_mode<synchronous>, transform_indices = @transform_3, window_bounds = array<i64: 128, 128>}, {transform_indices = @transform_4, window_bounds = array<i64: 16, 128>}]} {
    %c0 = arith.constant 0 : index
    %c0_0 = arith.constant 0 : index
    %0 = vector.load %arg1[%c0, %c0_0] : memref<16x1024xbf16, #tpu.memory_space<vmem>>, vector<16x1024xbf16>
    %c0_1 = arith.constant 0 : index
    %c0_2 = arith.constant 0 : index
    %1 = vector.load %arg2[%c0_1, %c0_2] : memref<1024x128xbf16, #tpu.memory_space<vmem>>, vector<1024x128xbf16>
    %cst = arith.constant dense<0.000000e+00> : vector<16x128xf32>
    %2 = tpu.matmul %0, %1, %cst {dimension_numbers = #tpu.dot_dimension_numbers<[1], [0], [0], [1], [0, 0, 1, 1], [], []>} : vector<16x1024xbf16>, vector<1024x128xbf16>, vector<16x128xf32> -> vector<16x128xf32>
    %cst_3 = arith.constant 0.000000e+00 : f32
    %3 = vector.broadcast %cst_3 : f32 to vector<16x128xf32>
    %4 = arith.maximumf %2, %3 : vector<16x128xf32>
    %5 = arith.truncf %4 : vector<16x128xf32> to vector<16x128xbf16>
    %c0_4 = arith.constant 0 : index
    %c0_5 = arith.constant 0 : index
    %6 = vector.load %arg3[%c0_4, %c0_5] : memref<128x128xbf16, #tpu.memory_space<vmem>>, vector<128x128xbf16>
    %cst_6 = arith.constant dense<0.000000e+00> : vector<16x128xf32>
    %7 = tpu.matmul %5, %6, %cst_6 {dimension_numbers = #tpu.dot_dimension_numbers<[1], [0], [0], [1], [0, 0, 1, 1], [], []>} : vector<16x128xbf16>, vector<128x128xbf16>, vector<16x128xf32> -> vector<16x128xf32>
    %cst_7 = arith.constant 0.000000e+00 : f32
    %8 = vector.broadcast %cst_7 : f32 to vector<16x128xf32>
    %9 = arith.maximumf %7, %8 : vector<16x128xf32>
    %10 = arith.truncf %9 : vector<16x128xf32> to vector<16x128xbf16>
    %c0_8 = arith.constant 0 : index
    %c0_9 = arith.constant 0 : index
    %11 = vector.load %arg4[%c0_8, %c0_9] : memref<128x128xbf16, #tpu.memory_space<vmem>>, vector<128x128xbf16>
    %cst_10 = arith.constant dense<0.000000e+00> : vector<16x128xf32>
    %12 = tpu.matmul %10, %11, %cst_10 {dimension_numbers = #tpu.dot_dimension_numbers<[1], [0], [0], [1], [0, 0, 1, 1], [], []>} : vector<16x128xbf16>, vector<128x128xbf16>, vector<16x128xf32> -> vector<16x128xf32>
    %c0_11 = arith.constant 0 : index
    %c0_12 = arith.constant 0 : index
    %13 = vector.load %arg5[%c0_11, %c0_12] : memref<16x128xf32, #tpu.memory_space<vmem>>, vector<16x128xf32>
    tpu.vector_store %arg5[%c0_11, %c0_12], %12 {strides = array<i32>} : memref<16x128xf32, #tpu.memory_space<vmem>>, vector<16x128xf32>,
    return
  }
  func.func @transform_0(%arg0: i32) -> (i32, i32) {
    %c0_i32 = arith.constant 0 : i32
    %c0_i32_0 = arith.constant 0 : i32
    return %arg0, %c0_i32 : i32, i32
  }
  func.func @transform_1(%arg0: i32) -> (i32, i32) {
    %c0_i32 = arith.constant 0 : i32
    %c0_i32_0 = arith.constant 0 : i32
    %c0_i32_1 = arith.constant 0 : i32
    return %c0_i32, %c0_i32_0 : i32, i32
  }
  func.func @transform_2(%arg0: i32) -> (i32, i32) {
    %c0_i32 = arith.constant 0 : i32
    %c0_i32_0 = arith.constant 0 : i32
    %c0_i32_1 = arith.constant 0 : i32
    return %c0_i32, %c0_i32_0 : i32, i32
  }
  func.func @transform_3(%arg0: i32) -> (i32, i32) {
    %c0_i32 = arith.constant 0 : i32
    %c0_i32_0 = arith.constant 0 : i32
    %c0_i32_1 = arith.constant 0 : i32
    return %c0_i32, %c0_i32_0 : i32, i32
  }
  func.func @transform_4(%arg0: i32) -> (i32, i32) {
    %c0_i32 = arith.constant 0 : i32
    %c0_i32_0 = arith.constant 0 : i32
    return %arg0, %c0_i32 : i32, i32
  }
}

</mosaic_0001>

<llo_original>
// kernel: tpu_custom_call.1
$region0: #{tpu_custom_call.1}
  #allocation0 [shape = 'u32[]', space=smem, size = 0x4, offset = 0x4, fixed_abs, tag = 'smem constant byte address 0x4 - core index']
  #allocation1 [shape = 'u32[144,128]{1,0:T(1,128)}', space=vmem, size = 0x12000, scoped, tag = 'internal scratch']
  %s0 = inlined_call_operand.hbm [shape: bf16[16,1024], index: 0, kind: input, shape index: {}]
  %s1 = inlined_call_operand.hbm [shape: bf16[1024,128], index: 1, kind: input, shape index: {}]
  %s2 = inlined_call_operand.hbm [shape: bf16[128,128], index: 2, kind: input, shape index: {}]
  %s3 = inlined_call_operand.hbm [shape: bf16[128,128], index: 3, kind: input, shape index: {}]
  %s4 = inlined_call_operand.hbm [shape: f32[16,128], index: 4, kind: output, shape index: {}]
  %s5 = sld [smem:[#allocation0]]
  $region42: #{tpu_custom_call.1} parent=0
    _
  %s7 = ssub.s32 1, %s5
  %s8 = scalar_select 0, %s7, %s5
  $region1: #{tpu_custom_call.1} parent=0
    #allocation2 [shape = 'u8[32768]{0}', space=vmem, size = 0x8000, scoped, tag = 'input window, operand 0, single buffered']
    #allocation3 [shape = 's32[1]{0}', space=sflag, size = 0x4, scoped, tag = 'scoped memory for tpu_custom_call.1']
    #allocation4 [shape = 's32[1]{0}', space=sflag, size = 0x4, scoped, tag = 'scoped memory for tpu_custom_call.1']
    #allocation5 [shape = 'u8[262144]{0}', space=vmem, size = 0x40000, scoped, tag = 'input window, operand 1, single buffered']
    #allocation6 [shape = 's32[1]{0}', space=sflag, size = 0x4, scoped, tag = 'scoped memory for tpu_custom_call.1']
    #allocation7 [shape = 'u8[32768]{0}', space=vmem, size = 0x8000, scoped, tag = 'input window, operand 2, single buffered']
    #allocation8 [shape = 'u8[32768]{0}', space=vmem, size = 0x8000, scoped, tag = 'input window, operand 3, single buffered']
    #allocation9 [shape = 's32[1]{0}', space=sflag, size = 0x4, scoped, tag = 'scoped memory for tpu_custom_call.1']
    #allocation10 [shape = 'u8[8192]{0}', space=vmem, size = 0x2000, scoped, tag = 'output window, operand 0, single buffered']
    %9 = vsyncpa [#allocation3], 0
    %10 = vsyncpa [#allocation6], 0
    %11 = vsyncpa [#allocation9], 0
    %12 = vsyncpa [#allocation4], 0
    // Predicated region
    $region2: #{tpu_custom_call.1} parent=1 // pred_check
      _
    $region3: #{tpu_custom_call.1} parent=1 // pred_check_branch
      %14 = sbr.rel (0) target = $region5
    $region4: #{tpu_custom_call.1} parent=1 // pred_region
      %s16 = ssub.s32 1024, 1024
      %17 = vsyncadd [#allocation3], %s16
      %s18 = sshll.u32 [#allocation2], 4
      %s19 = int_to_ptr.vmem [resolvable:$true] %s18
      %24 = dma.hbm_to_vmem [thread:$0]  %s0, 1024, %s19, [#allocation3], 512, 512, 32
    $region5: #{tpu_custom_call.1} parent=1 // pred_fallthru
      _
    // Predicated region
    $region6: #{tpu_custom_call.1} parent=1 // pred_check
      _
    $region7: #{tpu_custom_call.1} parent=1 // pred_check_branch
      %26 = sbr.rel (0) target = $region9
    $region8: #{tpu_custom_call.1} parent=1 // pred_region
      %s28 = ssub.s32 8192, 8192
      %29 = vsyncadd [#allocation6], %s28
      %s30 = sshll.u32 [#allocation5], 4
      %s31 = int_to_ptr.vmem [resolvable:$true] %s30
      %36 = dma.hbm_to_vmem [thread:$0]  %s1, 8192, %s31, [#allocation6], 64, 64, 4
    $region9: #{tpu_custom_call.1} parent=1 // pred_fallthru
      _
    // Predicated region
    $region10: #{tpu_custom_call.1} parent=1 // pred_check
      _
    $region11: #{tpu_custom_call.1} parent=1 // pred_check_branch
      %38 = sbr.rel (0) target = $region13
    $region12: #{tpu_custom_call.1} parent=1 // pred_region
      %s40 = ssub.s32 1024, 1024
      %41 = vsyncadd [#allocation6], %s40
      %s42 = sshll.u32 [#allocation7], 4
      %s43 = int_to_ptr.vmem [resolvable:$true] %s42
      %48 = dma.hbm_to_vmem [thread:$0]  %s2, 1024, %s43, [#allocation6], 64, 64, 4
    $region13: #{tpu_custom_call.1} parent=1 // pred_fallthru
      _
    // Predicated region
    $region14: #{tpu_custom_call.1} parent=1 // pred_check
      _
    $region15: #{tpu_custom_call.1} parent=1 // pred_check_branch
      %50 = sbr.rel (0) target = $region17
    $region16: #{tpu_custom_call.1} parent=1 // pred_region
      %s52 = ssub.s32 1024, 1024
      %53 = vsyncadd [#allocation9], %s52
      %s54 = sshll.u32 [#allocation8], 4
      %s55 = int_to_ptr.vmem [resolvable:$true] %s54
      %60 = dma.hbm_to_vmem [thread:$0]  %s3, 1024, %s55, [#allocation9], 64, 64, 4
    $region17: #{tpu_custom_call.1} parent=1 // pred_fallthru
      _
    // Predicated region
    $region18: #{tpu_custom_call.1} parent=1 // pred_check
      _
    $region19: #{tpu_custom_call.1} parent=1 // pred_check_branch
      %62 = sbr.rel (0) target = $region21
    $region20: #{tpu_custom_call.1} parent=1 // pred_region
      %63 = dma.done [#allocation3], 1024
    $region21: #{tpu_custom_call.1} parent=1 // pred_fallthru
      _
    // Predicated region
    $region22: #{tpu_custom_call.1} parent=1 // pred_check
      _
    $region23: #{tpu_custom_call.1} parent=1 // pred_check_branch
      %65 = sbr.rel (0) target = $region25
    $region24: #{tpu_custom_call.1} parent=1 // pred_region
      %66 = dma.done [#allocation6], 8192
    $region25: #{tpu_custom_call.1} parent=1 // pred_fallthru
      _
    // Predicated region
    $region26: #{tpu_custom_call.1} parent=1 // pred_check
      _
    $region27: #{tpu_custom_call.1} parent=1 // pred_check_branch
      %68 = sbr.rel (0) target = $region29
    $region28: #{tpu_custom_call.1} parent=1 // pred_region
      %69 = dma.done [#allocation6], 1024
    $region29: #{tpu_custom_call.1} parent=1 // pred_fallthru
      _
    // Predicated region
    $region30: #{tpu_custom_call.1} parent=1 // pred_check
      _
    $region31: #{tpu_custom_call.1} parent=1 // pred_check_branch
      %71 = sbr.rel (0) target = $region33
    $region32: #{tpu_custom_call.1} parent=1 // pred_region
      %72 = dma.done [#allocation9], 1024
    $region33: #{tpu_custom_call.1} parent=1 // pred_fallthru
      _
    %v74 = vld [vmem:[#allocation2] sm:$0xff]
    %v75 = vld [vmem:[#allocation2 + $0x8] sm:$0xff]
    %v76 = vld [vmem:[#allocation2 + $0x10] sm:$0xff]
    %v77 = vld [vmem:[#allocation2 + $0x18] sm:$0xff]
    %v78 = vld [vmem:[#allocation2 + $0x20] sm:$0xff]
    %v79 = vld [vmem:[#allocation2 + $0x28] sm:$0xff]
    %v80 = vld [vmem:[#allocation2 + $0x30] sm:$0xff]
    %v81 = vld [vmem:[#allocation2 + $0x38] sm:$0xff]
    %v82 = vld [vmem:[#allocation5] sm:$0xf]
    %v83 = vld [vmem:[#allocation5 + $0x4] sm:$0xf]
    %v84 = vld [vmem:[#allocation5 + $0x8] sm:$0xf]
    %v85 = vld [vmem:[#allocation5 + $0xc] sm:$0xf]
    %v86 = vld [vmem:[#allocation5 + $0x10] sm:$0xf]
    %v87 = vld [vmem:[#allocation5 + $0x14] sm:$0xf]
    %v88 = vld [vmem:[#allocation5 + $0x18] sm:$0xf]
    %v89 = vld [vmem:[#allocation5 + $0x1c] sm:$0xf]
    %v90 = vld [vmem:[#allocation5 + $0x20] sm:$0xf]
    %v91 = vld [vmem:[#allocation5 + $0x24] sm:$0xf]
    %v92 = vld [vmem:[#allocation5 + $0x28] sm:$0xf]
    %v93 = vld [vmem:[#allocation5 + $0x2c] sm:$0xf]
    %v94 = vld [vmem:[#allocation5 + $0x30] sm:$0xf]
    %v95 = vld [vmem:[#allocation5 + $0x34] sm:$0xf]
    %v96 = vld [vmem:[#allocation5 + $0x38] sm:$0xf]
    %v97 = vld [vmem:[#allocation5 + $0x3c] sm:$0xf]
    %v98 = vld [vmem:[#allocation5 + $0x40] sm:$0xf]
    %v99 = vld [vmem:[#allocation5 + $0x44] sm:$0xf]
    %v100 = vld [vmem:[#allocation5 + $0x48] sm:$0xf]
    %v101 = vld [vmem:[#allocation5 + $0x4c] sm:$0xf]
    %v102 = vld [vmem:[#allocation5 + $0x50] sm:$0xf]
    %v103 = vld [vmem:[#allocation5 + $0x54] sm:$0xf]
    %v104 = vld [vmem:[#allocation5 + $0x58] sm:$0xf]
    %v105 = vld [vmem:[#allocation5 + $0x5c] sm:$0xf]
    %v106 = vld [vmem:[#allocation5 + $0x60] sm:$0xf]
    %v107 = vld [vmem:[#allocation5 + $0x64] sm:$0xf]
    %v108 = vld [vmem:[#allocation5 + $0x68] sm:$0xf]
    %v109 = vld [vmem:[#allocation5 + $0x6c] sm:$0xf]
    %v110 = vld [vmem:[#allocation5 + $0x70] sm:$0xf]
    %v111 = vld [vmem:[#allocation5 + $0x74] sm:$0xf]
    %v112 = vld [vmem:[#allocation5 + $0x78] sm:$0xf]
    %v113 = vld [vmem:[#allocation5 + $0x7c] sm:$0xf]
    %v114 = vld [vmem:[#allocation5 + $0x80] sm:$0xf]
    %v115 = vld [vmem:[#allocation5 + $0x84] sm:$0xf]
    %v116 = vld [vmem:[#allocation5 + $0x88] sm:$0xf]
    %v117 = vld [vmem:[#allocation5 + $0x8c] sm:$0xf]
    %v118 = vld [vmem:[#allocation5 + $0x90] sm:$0xf]
    %v119 = vld [vmem:[#allocation5 + $0x94] sm:$0xf]
    %v120 = vld [vmem:[#allocation5 + $0x98] sm:$0xf]
    %v121 = vld [vmem:[#allocation5 + $0x9c] sm:$0xf]
    %v122 = vld [vmem:[#allocation5 + $0xa0] sm:$0xf]
    %v123 = vld [vmem:[#allocation5 + $0xa4] sm:$0xf]
    %v124 = vld [vmem:[#allocation5 + $0xa8] sm:$0xf]
    %v125 = vld [vmem:[#allocation5 + $0xac] sm:$0xf]
    %v126 = vld [vmem:[#allocation5 + $0xb0] sm:$0xf]
    %v127 = vld [vmem:[#allocation5 + $0xb4] sm:$0xf]
    %v128 = vld [vmem:[#allocation5 + $0xb8] sm:$0xf]
    %v129 = vld [vmem:[#allocation5 + $0xbc] sm:$0xf]
    %v130 = vld [vmem:[#allocation5 + $0xc0] sm:$0xf]
    %v131 = vld [vmem:[#allocation5 + $0xc4] sm:$0xf]
    %v132 = vld [vmem:[#allocation5 + $0xc8] sm:$0xf]
    %v133 = vld [vmem:[#allocation5 + $0xcc] sm:$0xf]
    %v134 = vld [vmem:[#allocation5 + $0xd0] sm:$0xf]
    %v135 = vld [vmem:[#allocation5 + $0xd4] sm:$0xf]
    %v136 = vld [vmem:[#allocation5 + $0xd8] sm:$0xf]
    %v137 = vld [vmem:[#allocation5 + $0xdc] sm:$0xf]
    %v138 = vld [vmem:[#allocation5 + $0xe0] sm:$0xf]
    %v139 = vld [vmem:[#allocation5 + $0xe4] sm:$0xf]
    %v140 = vld [vmem:[#allocation5 + $0xe8] sm:$0xf]
    %v141 = vld [vmem:[#allocation5 + $0xec] sm:$0xf]
    %v142 = vld [vmem:[#allocation5 + $0xf0] sm:$0xf]
    %v143 = vld [vmem:[#allocation5 + $0xf4] sm:$0xf]
    %v144 = vld [vmem:[#allocation5 + $0xf8] sm:$0xf]
    %v145 = vld [vmem:[#allocation5 + $0xfc] sm:$0xf]
    %v146 = vld [vmem:[#allocation5 + $0x100] sm:$0xf]
    %v147 = vld [vmem:[#allocation5 + $0x104] sm:$0xf]
    %v148 = vld [vmem:[#allocation5 + $0x108] sm:$0xf]
    %v149 = vld [vmem:[#allocation5 + $0x10c] sm:$0xf]
    %v150 = vld [vmem:[#allocation5 + $0x110] sm:$0xf]
    %v151 = vld [vmem:[#allocation5 + $0x114] sm:$0xf]
    %v152 = vld [vmem:[#allocation5 + $0x118] sm:$0xf]
    %v153 = vld [vmem:[#allocation5 + $0x11c] sm:$0xf]
    %v154 = vld [vmem:[#allocation5 + $0x120] sm:$0xf]
    %v155 = vld [vmem:[#allocation5 + $0x124] sm:$0xf]
    %v156 = vld [vmem:[#allocation5 + $0x128] sm:$0xf]
    %v157 = vld [vmem:[#allocation5 + $0x12c] sm:$0xf]
    %v158 = vld [vmem:[#allocation5 + $0x130] sm:$0xf]
    %v159 = vld [vmem:[#allocation5 + $0x134] sm:$0xf]
    %v160 = vld [vmem:[#allocation5 + $0x138] sm:$0xf]
    %v161 = vld [vmem:[#allocation5 + $0x13c] sm:$0xf]
    %v162 = vld [vmem:[#allocation5 + $0x140] sm:$0xf]
    %v163 = vld [vmem:[#allocation5 + $0x144] sm:$0xf]
    %v164 = vld [vmem:[#allocation5 + $0x148] sm:$0xf]
    %v165 = vld [vmem:[#allocation5 + $0x14c] sm:$0xf]
    %v166 = vld [vmem:[#allocation5 + $0x150] sm:$0xf]
    %v167 = vld [vmem:[#allocation5 + $0x154] sm:$0xf]
    %v168 = vld [vmem:[#allocation5 + $0x158] sm:$0xf]
    %v169 = vld [vmem:[#allocation5 + $0x15c] sm:$0xf]
    %v170 = vld [vmem:[#allocation5 + $0x160] sm:$0xf]
    %v171 = vld [vmem:[#allocation5 + $0x164] sm:$0xf]
    %v172 = vld [vmem:[#allocation5 + $0x168] sm:$0xf]
    %v173 = vld [vmem:[#allocation5 + $0x16c] sm:$0xf]
    %v174 = vld [vmem:[#allocation5 + $0x170] sm:$0xf]
    %v175 = vld [vmem:[#allocation5 + $0x174] sm:$0xf]
    %v176 = vld [vmem:[#allocation5 + $0x178] sm:$0xf]
    %v177 = vld [vmem:[#allocation5 + $0x17c] sm:$0xf]
    %v178 = vld [vmem:[#allocation5 + $0x180] sm:$0xf]
    %v179 = vld [vmem:[#allocation5 + $0x184] sm:$0xf]
    %v180 = vld [vmem:[#allocation5 + $0x188] sm:$0xf]
    %v181 = vld [vmem:[#allocation5 + $0x18c] sm:$0xf]
    %v182 = vld [vmem:[#allocation5 + $0x190] sm:$0xf]
    %v183 = vld [vmem:[#allocation5 + $0x194] sm:$0xf]
    %v184 = vld [vmem:[#allocation5 + $0x198] sm:$0xf]
    %v185 = vld [vmem:[#allocation5 + $0x19c] sm:$0xf]
    %v186 = vld [vmem:[#allocation5 + $0x1a0] sm:$0xf]
    %v187 = vld [vmem:[#allocation5 + $0x1a4] sm:$0xf]
    %v188 = vld [vmem:[#allocation5 + $0x1a8] sm:$0xf]
    %v189 = vld [vmem:[#allocation5 + $0x1ac] sm:$0xf]
    %v190 = vld [vmem:[#allocation5 + $0x1b0] sm:$0xf]
    %v191 = vld [vmem:[#allocation5 + $0x1b4] sm:$0xf]
    %v192 = vld [vmem:[#allocation5 + $0x1b8] sm:$0xf]
    %v193 = vld [vmem:[#allocation5 + $0x1bc] sm:$0xf]
    %v194 = vld [vmem:[#allocation5 + $0x1c0] sm:$0xf]
    %v195 = vld [vmem:[#allocation5 + $0x1c4] sm:$0xf]
    %v196 = vld [vmem:[#allocation5 + $0x1c8] sm:$0xf]
    %v197 = vld [vmem:[#allocation5 + $0x1cc] sm:$0xf]
    %v198 = vld [vmem:[#allocation5 + $0x1d0] sm:$0xf]
    %v199 = vld [vmem:[#allocation5 + $0x1d4] sm:$0xf]
    %v200 = vld [vmem:[#allocation5 + $0x1d8] sm:$0xf]
    %v201 = vld [vmem:[#allocation5 + $0x1dc] sm:$0xf]
    %v202 = vld [vmem:[#allocation5 + $0x1e0] sm:$0xf]
    %v203 = vld [vmem:[#allocation5 + $0x1e4] sm:$0xf]
    %v204 = vld [vmem:[#allocation5 + $0x1e8] sm:$0xf]
    %v205 = vld [vmem:[#allocation5 + $0x1ec] sm:$0xf]
    %v206 = vld [vmem:[#allocation5 + $0x1f0] sm:$0xf]
    %v207 = vld [vmem:[#allocation5 + $0x1f4] sm:$0xf]
    %v208 = vld [vmem:[#allocation5 + $0x1f8] sm:$0xf]
    %v209 = vld [vmem:[#allocation5 + $0x1fc] sm:$0xf]
    %v218 = vunpack.c.l.b16 %v74
    %v219 = vunpack.c.h.b16 %v74
    %v220 = vunpack.c.l.b16 %v75
    %v221 = vunpack.c.h.b16 %v75
    %v222 = vunpack.c.l.b16 %v76
    %v223 = vunpack.c.h.b16 %v76
    %v224 = vunpack.c.l.b16 %v77
    %v225 = vunpack.c.h.b16 %v77
    %v226 = vunpack.c.l.b16 %v78
    %v227 = vunpack.c.h.b16 %v78
    %v228 = vunpack.c.l.b16 %v79
    %v229 = vunpack.c.h.b16 %v79
    %v230 = vunpack.c.l.b16 %v80
    %v231 = vunpack.c.h.b16 %v80
    %v232 = vunpack.c.l.b16 %v81
    %v233 = vunpack.c.h.b16 %v81
    %v234 = vpack.c.b16 %v226, %v218
    %v235 = vpack.c.b16 %v227, %v219
    %v236 = vpack.c.b16 %v228, %v220
    %v237 = vpack.c.b16 %v229, %v221
    %v238 = vpack.c.b16 %v230, %v222
    %v239 = vpack.c.b16 %v231, %v223
    %v240 = vpack.c.b16 %v232, %v224
    %v241 = vpack.c.b16 %v233, %v225
    %v378 = vunpack.c.l.b16 %v82
    %v379 = vunpack.c.l.b16 %v83
    %v380 = vunpack.c.l.b16 %v84
    %v381 = vunpack.c.l.b16 %v85
    %v382 = vunpack.c.l.b16 %v86
    %v383 = vunpack.c.l.b16 %v87
    %v384 = vunpack.c.l.b16 %v88
    %v385 = vunpack.c.l.b16 %v89
    %v386 = vunpack.c.l.b16 %v90
    %v387 = vunpack.c.l.b16 %v91
    %v388 = vunpack.c.l.b16 %v92
    %v389 = vunpack.c.l.b16 %v93
    %v390 = vunpack.c.l.b16 %v94
    %v391 = vunpack.c.l.b16 %v95
    %v392 = vunpack.c.l.b16 %v96
    %v393 = vunpack.c.l.b16 %v97
    %v394 = vunpack.c.l.b16 %v98
    %v395 = vunpack.c.l.b16 %v99
    %v396 = vunpack.c.l.b16 %v100
    %v397 = vunpack.c.l.b16 %v101
    %v398 = vunpack.c.l.b16 %v102
    %v399 = vunpack.c.l.b16 %v103
    %v400 = vunpack.c.l.b16 %v104
    %v401 = vunpack.c.l.b16 %v105
    %v402 = vunpack.c.l.b16 %v106
    %v403 = vunpack.c.l.b16 %v107
    %v404 = vunpack.c.l.b16 %v108
    %v405 = vunpack.c.l.b16 %v109
    %v406 = vunpack.c.l.b16 %v110
    %v407 = vunpack.c.l.b16 %v111
    %v408 = vunpack.c.l.b16 %v112
    %v409 = vunpack.c.l.b16 %v113
    %v410 = vunpack.c.l.b16 %v114
    %v411 = vunpack.c.l.b16 %v115
    %v412 = vunpack.c.l.b16 %v116
    %v413 = vunpack.c.l.b16 %v117
    %v414 = vunpack.c.l.b16 %v118
    %v415 = vunpack.c.l.b16 %v119
    %v416 = vunpack.c.l.b16 %v120
    %v417 = vunpack.c.l.b16 %v121
    %v418 = vunpack.c.l.b16 %v122
    %v419 = vunpack.c.l.b16 %v123
    %v420 = vunpack.c.l.b16 %v124
    %v421 = vunpack.c.l.b16 %v125
    %v422 = vunpack.c.l.b16 %v126
    %v423 = vunpack.c.l.b16 %v127
    %v424 = vunpack.c.l.b16 %v128
    %v425 = vunpack.c.l.b16 %v129
    %v426 = vunpack.c.l.b16 %v130
    %v427 = vunpack.c.l.b16 %v131
    %v428 = vunpack.c.l.b16 %v132
    %v429 = vunpack.c.l.b16 %v133
    %v430 = vunpack.c.l.b16 %v134
    %v431 = vunpack.c.l.b16 %v135
    %v432 = vunpack.c.l.b16 %v136
    %v433 = vunpack.c.l.b16 %v137
    %v434 = vunpack.c.l.b16 %v138
    %v435 = vunpack.c.l.b16 %v139
    %v436 = vunpack.c.l.b16 %v140
    %v437 = vunpack.c.l.b16 %v141
    %v438 = vunpack.c.l.b16 %v142
    %v439 = vunpack.c.l.b16 %v143
    %v440 = vunpack.c.l.b16 %v144
    %v441 = vunpack.c.l.b16 %v145
    %v442 = vunpack.c.l.b16 %v146
    %v443 = vunpack.c.l.b16 %v147
    %v444 = vunpack.c.l.b16 %v148
    %v445 = vunpack.c.l.b16 %v149
    %v446 = vunpack.c.l.b16 %v150
    %v447 = vunpack.c.l.b16 %v151
    %v448 = vunpack.c.l.b16 %v152
    %v449 = vunpack.c.l.b16 %v153
    %v450 = vunpack.c.l.b16 %v154
    %v451 = vunpack.c.l.b16 %v155
    %v452 = vunpack.c.l.b16 %v156
    %v453 = vunpack.c.l.b16 %v157
    %v454 = vunpack.c.l.b16 %v158
    %v455 = vunpack.c.l.b16 %v159
    %v456 = vunpack.c.l.b16 %v160
    %v457 = vunpack.c.l.b16 %v161
    %v458 = vunpack.c.l.b16 %v162
    %v459 = vunpack.c.l.b16 %v163
    %v460 = vunpack.c.l.b16 %v164
    %v461 = vunpack.c.l.b16 %v165
    %v462 = vunpack.c.l.b16 %v166
    %v463 = vunpack.c.l.b16 %v167
    %v464 = vunpack.c.l.b16 %v168
    %v465 = vunpack.c.l.b16 %v169
    %v466 = vunpack.c.l.b16 %v170
    %v467 = vunpack.c.l.b16 %v171
    %v468 = vunpack.c.l.b16 %v172
    %v469 = vunpack.c.l.b16 %v173
    %v470 = vunpack.c.l.b16 %v174
    %v471 = vunpack.c.l.b16 %v175
    %v472 = vunpack.c.l.b16 %v176
    %v473 = vunpack.c.l.b16 %v177
    %v474 = vunpack.c.l.b16 %v178
    %v475 = vunpack.c.l.b16 %v179
    %v476 = vunpack.c.l.b16 %v180
    %v477 = vunpack.c.l.b16 %v181
    %v478 = vunpack.c.l.b16 %v182
    %v479 = vunpack.c.l.b16 %v183
    %v480 = vunpack.c.l.b16 %v184
    %v481 = vunpack.c.l.b16 %v185
    %v482 = vunpack.c.l.b16 %v186
    %v483 = vunpack.c.l.b16 %v187
    %v484 = vunpack.c.l.b16 %v188
    %v485 = vunpack.c.l.b16 %v189
    %v486 = vunpack.c.l.b16 %v190
    %v487 = vunpack.c.l.b16 %v191
    %v488 = vunpack.c.l.b16 %v192
    %v489 = vunpack.c.l.b16 %v193
    %v490 = vunpack.c.l.b16 %v194
    %v491 = vunpack.c.l.b16 %v195
    %v492 = vunpack.c.l.b16 %v196
    %v493 = vunpack.c.l.b16 %v197
    %v494 = vunpack.c.l.b16 %v198
    %v495 = vunpack.c.l.b16 %v199
    %v496 = vunpack.c.l.b16 %v200
    %v497 = vunpack.c.l.b16 %v201
    %v498 = vunpack.c.l.b16 %v202
    %v499 = vunpack.c.l.b16 %v203
    %v500 = vunpack.c.l.b16 %v204
    %v501 = vunpack.c.l.b16 %v205
    %v502 = vunpack.c.l.b16 %v206
    %v503 = vunpack.c.l.b16 %v207
    %v504 = vunpack.c.l.b16 %v208
    %v505 = vunpack.c.l.b16 %v209
    %v506 = vpack.c.b16 %v379, %v378
    %v507 = vpack.c.b16 %v381, %v380
    %v508 = vpack.c.b16 %v383, %v382
    %v509 = vpack.c.b16 %v385, %v384
    %v510 = vpack.c.b16 %v387, %v386
    %v511 = vpack.c.b16 %v389, %v388
    %v512 = vpack.c.b16 %v391, %v390
    %v513 = vpack.c.b16 %v393, %v392
    %v514 = vpack.c.b16 %v395, %v394
    %v515 = vpack.c.b16 %v397, %v396
    %v516 = vpack.c.b16 %v399, %v398
    %v517 = vpack.c.b16 %v401, %v400
    %v518 = vpack.c.b16 %v403, %v402
    %v519 = vpack.c.b16 %v405, %v404
    %v520 = vpack.c.b16 %v407, %v406
    %v521 = vpack.c.b16 %v409, %v408
    %v522 = vpack.c.b16 %v411, %v410
    %v523 = vpack.c.b16 %v413, %v412
    %v524 = vpack.c.b16 %v415, %v414
    %v525 = vpack.c.b16 %v417, %v416
    %v526 = vpack.c.b16 %v419, %v418
    %v527 = vpack.c.b16 %v421, %v420
    %v528 = vpack.c.b16 %v423, %v422
    %v529 = vpack.c.b16 %v425, %v424
    %v530 = vpack.c.b16 %v427, %v426
    %v531 = vpack.c.b16 %v429, %v428
    %v532 = vpack.c.b16 %v431, %v430
    %v533 = vpack.c.b16 %v433, %v432
    %v534 = vpack.c.b16 %v435, %v434
    %v535 = vpack.c.b16 %v437, %v436
    %v536 = vpack.c.b16 %v439, %v438
    %v537 = vpack.c.b16 %v441, %v440
    %v538 = vpack.c.b16 %v443, %v442
    %v539 = vpack.c.b16 %v445, %v444
    %v540 = vpack.c.b16 %v447, %v446
    %v541 = vpack.c.b16 %v449, %v448
    %v542 = vpack.c.b16 %v451, %v450
    %v543 = vpack.c.b16 %v453, %v452
    %v544 = vpack.c.b16 %v455, %v454
    %v545 = vpack.c.b16 %v457, %v456
    %v546 = vpack.c.b16 %v459, %v458
    %v547 = vpack.c.b16 %v461, %v460
    %v548 = vpack.c.b16 %v463, %v462
    %v549 = vpack.c.b16 %v465, %v464
    %v550 = vpack.c.b16 %v467, %v466
    %v551 = vpack.c.b16 %v469, %v468
    %v552 = vpack.c.b16 %v471, %v470
    %v553 = vpack.c.b16 %v473, %v472
    %v554 = vpack.c.b16 %v475, %v474
    %v555 = vpack.c.b16 %v477, %v476
    %v556 = vpack.c.b16 %v479, %v478
    %v557 = vpack.c.b16 %v481, %v480
    %v558 = vpack.c.b16 %v483, %v482
    %v559 = vpack.c.b16 %v485, %v484
    %v560 = vpack.c.b16 %v487, %v486
    %v561 = vpack.c.b16 %v489, %v488
    %v562 = vpack.c.b16 %v491, %v490
    %v563 = vpack.c.b16 %v493, %v492
    %v564 = vpack.c.b16 %v495, %v494
    %v565 = vpack.c.b16 %v497, %v496
    %v566 = vpack.c.b16 %v499, %v498
    %v567 = vpack.c.b16 %v501, %v500
    %v568 = vpack.c.b16 %v503, %v502
    %v569 = vpack.c.b16 %v505, %v504
    %634 = vmatprep.subr.bf16.mxu0 0
    %635 = vmatpush1.bf16.msra.mxu0 %v506
    %636 = vmatprep.subr.bf16.mxu0 0
    %637 = vmatpush1.bf16.msra.mxu0 %v507
    %638 = vmatprep.subr.bf16.mxu0 0
    %639 = vmatpush1.bf16.msra.mxu0 %v508
    %640 = vmatprep.subr.bf16.mxu0 0
    %641 = vmatpush1.bf16.msra.mxu0 %v509
    %642 = vmatprep.subr.bf16.mxu0 0
    %643 = vmatpush1.bf16.msra.mxu0 %v510
    %644 = vmatprep.subr.bf16.mxu0 0
    %645 = vmatpush1.bf16.msra.mxu0 %v511
    %646 = vmatprep.subr.bf16.mxu0 0
    %647 = vmatpush1.bf16.msra.mxu0 %v512
    %648 = vmatprep.subr.bf16.mxu0 0
    %649 = vmatpush1.bf16.msra.mxu0 %v513
    %650 = vmatprep.subr.bf16.mxu0 0
    %651 = vmatpush1.bf16.msra.mxu0 %v514
    %652 = vmatprep.subr.bf16.mxu0 0
    %653 = vmatpush1.bf16.msra.mxu0 %v515
    %654 = vmatprep.subr.bf16.mxu0 0
    %655 = vmatpush1.bf16.msra.mxu0 %v516
    %656 = vmatprep.subr.bf16.mxu0 0
    %657 = vmatpush1.bf16.msra.mxu0 %v517
    %658 = vmatprep.subr.bf16.mxu0 0
    %659 = vmatpush1.bf16.msra.mxu0 %v518
    %660 = vmatprep.subr.bf16.mxu0 0
    %661 = vmatpush1.bf16.msra.mxu0 %v519
    %662 = vmatprep.subr.bf16.mxu0 0
    %663 = vmatpush1.bf16.msra.mxu0 %v520
    %664 = vmatprep.subr.bf16.mxu0 0
    %665 = vmatpush1.bf16.msra.mxu0 %v521
    %666 = vmatprep.mubr.bf16.mxu0 %v235
    %667 = vmatmul.mubr.bf16.gmra.mrb[0].mxu0 %v234
    %v668 = vpop.f32.mrb[0].mxu0
    %v669 = vadd.f32 0.0, %v668
    %v670 = vpop.f32.mrb[0].mxu0
    %v671 = vpop.f32.mrb[0].mxu0
    %v672 = vadd.f32 0.0, %v671
    %v673 = vpop.f32.mrb[0].mxu0
    %674 = vdwg.mxu0
    %675 = vmatprep.subr.bf16.mxu0 0
    %676 = vmatpush1.bf16.msra.mxu0 %v522
    %677 = vmatprep.subr.bf16.mxu0 0
    %678 = vmatpush1.bf16.msra.mxu0 %v523
    %679 = vmatprep.subr.bf16.mxu0 0
    %680 = vmatpush1.bf16.msra.mxu0 %v524
    %681 = vmatprep.subr.bf16.mxu0 0
    %682 = vmatpush1.bf16.msra.mxu0 %v525
    %683 = vmatprep.subr.bf16.mxu0 0
    %684 = vmatpush1.bf16.msra.mxu0 %v526
    %685 = vmatprep.subr.bf16.mxu0 0
    %686 = vmatpush1.bf16.msra.mxu0 %v527
    %687 = vmatprep.subr.bf16.mxu0 0
    %688 = vmatpush1.bf16.msra.mxu0 %v528
    %689 = vmatprep.subr.bf16.mxu0 0
    %690 = vmatpush1.bf16.msra.mxu0 %v529
    %691 = vmatprep.subr.bf16.mxu0 0
    %692 = vmatpush1.bf16.msra.mxu0 %v530
    %693 = vmatprep.subr.bf16.mxu0 0
    %694 = vmatpush1.bf16.msra.mxu0 %v531
    %695 = vmatprep.subr.bf16.mxu0 0
    %696 = vmatpush1.bf16.msra.mxu0 %v532
    %697 = vmatprep.subr.bf16.mxu0 0
    %698 = vmatpush1.bf16.msra.mxu0 %v533
    %699 = vmatprep.subr.bf16.mxu0 0
    %700 = vmatpush1.bf16.msra.mxu0 %v534
    %701 = vmatprep.subr.bf16.mxu0 0
    %702 = vmatpush1.bf16.msra.mxu0 %v535
    %703 = vmatprep.subr.bf16.mxu0 0
    %704 = vmatpush1.bf16.msra.mxu0 %v536
    %705 = vmatprep.subr.bf16.mxu0 0
    %706 = vmatpush1.bf16.msra.mxu0 %v537
    %707 = vmatprep.mubr.bf16.mxu0 %v237
    %708 = vmatmul.mubr.bf16.gmra.mrb[0].mxu0 %v236
    %v709 = vpop.f32.mrb[0].mxu0
    %v710 = vadd.f32 %v669, %v709
    %v711 = vpop.f32.mrb[0].mxu0
    %v712 = vpop.f32.mrb[0].mxu0
    %v713 = vadd.f32 %v672, %v712
    %v714 = vpop.f32.mrb[0].mxu0
    %715 = vdwg.mxu0
    %716 = vmatprep.subr.bf16.mxu0 0
    %717 = vmatpush1.bf16.msra.mxu0 %v538
    %718 = vmatprep.subr.bf16.mxu0 0
    %719 = vmatpush1.bf16.msra.mxu0 %v539
    %720 = vmatprep.subr.bf16.mxu0 0
    %721 = vmatpush1.bf16.msra.mxu0 %v540
    %722 = vmatprep.subr.bf16.mxu0 0
    %723 = vmatpush1.bf16.msra.mxu0 %v541
    %724 = vmatprep.subr.bf16.mxu0 0
    %725 = vmatpush1.bf16.msra.mxu0 %v542
    %726 = vmatprep.subr.bf16.mxu0 0
    %727 = vmatpush1.bf16.msra.mxu0 %v543
    %728 = vmatprep.subr.bf16.mxu0 0
    %729 = vmatpush1.bf16.msra.mxu0 %v544
    %730 = vmatprep.subr.bf16.mxu0 0
    %731 = vmatpush1.bf16.msra.mxu0 %v545
    %732 = vmatprep.subr.bf16.mxu0 0
    %733 = vmatpush1.bf16.msra.mxu0 %v546
    %734 = vmatprep.subr.bf16.mxu0 0
    %735 = vmatpush1.bf16.msra.mxu0 %v547
    %736 = vmatprep.subr.bf16.mxu0 0
    %737 = vmatpush1.bf16.msra.mxu0 %v548
    %738 = vmatprep.subr.bf16.mxu0 0
    %739 = vmatpush1.bf16.msra.mxu0 %v549
    %740 = vmatprep.subr.bf16.mxu0 0
    %741 = vmatpush1.bf16.msra.mxu0 %v550
    %742 = vmatprep.subr.bf16.mxu0 0
    %743 = vmatpush1.bf16.msra.mxu0 %v551
    %744 = vmatprep.subr.bf16.mxu0 0
    %745 = vmatpush1.bf16.msra.mxu0 %v552
    %746 = vmatprep.subr.bf16.mxu0 0
    %747 = vmatpush1.bf16.msra.mxu0 %v553
    %748 = vmatprep.mubr.bf16.mxu0 %v239
    %749 = vmatmul.mubr.bf16.gmra.mrb[0].mxu0 %v238
    %v750 = vpop.f32.mrb[0].mxu0
    %v751 = vadd.f32 %v710, %v750
    %v752 = vpop.f32.mrb[0].mxu0
    %v753 = vpop.f32.mrb[0].mxu0
    %v754 = vadd.f32 %v713, %v753
    %v755 = vpop.f32.mrb[0].mxu0
    %756 = vdwg.mxu0
    %757 = vmatprep.subr.bf16.mxu0 0
    %758 = vmatpush1.bf16.msra.mxu0 %v554
    %759 = vmatprep.subr.bf16.mxu0 0
    %760 = vmatpush1.bf16.msra.mxu0 %v555
    %761 = vmatprep.subr.bf16.mxu0 0
    %762 = vmatpush1.bf16.msra.mxu0 %v556
    %763 = vmatprep.subr.bf16.mxu0 0
    %764 = vmatpush1.bf16.msra.mxu0 %v557
    %765 = vmatprep.subr.bf16.mxu0 0
    %766 = vmatpush1.bf16.msra.mxu0 %v558
    %767 = vmatprep.subr.bf16.mxu0 0
    %768 = vmatpush1.bf16.msra.mxu0 %v559
    %769 = vmatprep.subr.bf16.mxu0 0
    %770 = vmatpush1.bf16.msra.mxu0 %v560
    %771 = vmatprep.subr.bf16.mxu0 0
    %772 = vmatpush1.bf16.msra.mxu0 %v561
    %773 = vmatprep.subr.bf16.mxu0 0
    %774 = vmatpush1.bf16.msra.mxu0 %v562
    %775 = vmatprep.subr.bf16.mxu0 0
    %776 = vmatpush1.bf16.msra.mxu0 %v563
    %777 = vmatprep.subr.bf16.mxu0 0
    %778 = vmatpush1.bf16.msra.mxu0 %v564
    %779 = vmatprep.subr.bf16.mxu0 0
    %780 = vmatpush1.bf16.msra.mxu0 %v565
    %781 = vmatprep.subr.bf16.mxu0 0
    %782 = vmatpush1.bf16.msra.mxu0 %v566
    %783 = vmatprep.subr.bf16.mxu0 0
    %784 = vmatpush1.bf16.msra.mxu0 %v567
    %785 = vmatprep.subr.bf16.mxu0 0
    %786 = vmatpush1.bf16.msra.mxu0 %v568
    %787 = vmatprep.subr.bf16.mxu0 0
    %788 = vmatpush1.bf16.msra.mxu0 %v569
    %789 = vmatprep.mubr.bf16.mxu0 %v241
    %790 = vmatmul.mubr.bf16.gmra.mrb[0].mxu0 %v240
    %v791 = vpop.f32.mrb[0].mxu0
    %v792 = vadd.f32 %v751, %v791
    %v793 = vpop.f32.mrb[0].mxu0
    %v794 = vpop.f32.mrb[0].mxu0
    %v795 = vadd.f32 %v754, %v794
    %v796 = vpop.f32.mrb[0].mxu0
    %797 = vdwg.mxu0
    %v798 = vmax.f32 %v792, 0.0
    %v799 = vmax.f32 %v795, 0.0
    %v800 = vpack.c.bf16 %v799, %v798
    %v801 = vld [vmem:[#allocation7] sm:$0xf]
    %v802 = vld [vmem:[#allocation7 + $0x4] sm:$0xf]
    %v803 = vld [vmem:[#allocation7 + $0x8] sm:$0xf]
    %v804 = vld [vmem:[#allocation7 + $0xc] sm:$0xf]
    %v805 = vld [vmem:[#allocation7 + $0x10] sm:$0xf]
    %v806 = vld [vmem:[#allocation7 + $0x14] sm:$0xf]
    %v807 = vld [vmem:[#allocation7 + $0x18] sm:$0xf]
    %v808 = vld [vmem:[#allocation7 + $0x1c] sm:$0xf]
    %v809 = vld [vmem:[#allocation7 + $0x20] sm:$0xf]
    %v810 = vld [vmem:[#allocation7 + $0x24] sm:$0xf]
    %v811 = vld [vmem:[#allocation7 + $0x28] sm:$0xf]
    %v812 = vld [vmem:[#allocation7 + $0x2c] sm:$0xf]
    %v813 = vld [vmem:[#allocation7 + $0x30] sm:$0xf]
    %v814 = vld [vmem:[#allocation7 + $0x34] sm:$0xf]
    %v815 = vld [vmem:[#allocation7 + $0x38] sm:$0xf]
    %v816 = vld [vmem:[#allocation7 + $0x3c] sm:$0xf]
    %v833 = vunpack.c.l.b16 %v801
    %v834 = vunpack.c.l.b16 %v802
    %v835 = vunpack.c.l.b16 %v803
    %v836 = vunpack.c.l.b16 %v804
    %v837 = vunpack.c.l.b16 %v805
    %v838 = vunpack.c.l.b16 %v806
    %v839 = vunpack.c.l.b16 %v807
    %v840 = vunpack.c.l.b16 %v808
    %v841 = vunpack.c.l.b16 %v809
    %v842 = vunpack.c.l.b16 %v810
    %v843 = vunpack.c.l.b16 %v811
    %v844 = vunpack.c.l.b16 %v812
    %v845 = vunpack.c.l.b16 %v813
    %v846 = vunpack.c.l.b16 %v814
    %v847 = vunpack.c.l.b16 %v815
    %v848 = vunpack.c.l.b16 %v816
    %v849 = vpack.c.b16 %v834, %v833
    %v850 = vpack.c.b16 %v836, %v835
    %v851 = vpack.c.b16 %v838, %v837
    %v852 = vpack.c.b16 %v840, %v839
    %v853 = vpack.c.b16 %v842, %v841
    %v854 = vpack.c.b16 %v844, %v843
    %v855 = vpack.c.b16 %v846, %v845
    %v856 = vpack.c.b16 %v848, %v847
    %865 = vmatprep.subr.bf16.mxu0 0
    %866 = vmatpush1.bf16.msra.mxu0 %v849
    %867 = vmatprep.subr.bf16.mxu0 0
    %868 = vmatpush1.bf16.msra.mxu0 %v850
    %869 = vmatprep.subr.bf16.mxu0 0
    %870 = vmatpush1.bf16.msra.mxu0 %v851
    %871 = vmatprep.subr.bf16.mxu0 0
    %872 = vmatpush1.bf16.msra.mxu0 %v852
    %873 = vmatprep.subr.bf16.mxu0 0
    %874 = vmatpush1.bf16.msra.mxu0 %v853
    %875 = vmatprep.subr.bf16.mxu0 0
    %876 = vmatpush1.bf16.msra.mxu0 %v854
    %877 = vmatprep.subr.bf16.mxu0 0
    %878 = vmatpush1.bf16.msra.mxu0 %v855
    %879 = vmatprep.subr.bf16.mxu0 0
    %880 = vmatpush1.bf16.msra.mxu0 %v856
    %881 = vmatprep.subr.bf16.mxu0 0
    %882 = vmatpush1.bf16.msra.mxu0 0
    %883 = vmatprep.subr.bf16.mxu0 0
    %884 = vmatpush1.bf16.msra.mxu0 0
    %885 = vmatprep.subr.bf16.mxu0 0
    %886 = vmatpush1.bf16.msra.mxu0 0
    %887 = vmatprep.subr.bf16.mxu0 0
    %888 = vmatpush1.bf16.msra.mxu0 0
    %889 = vmatprep.subr.bf16.mxu0 0
    %890 = vmatpush1.bf16.msra.mxu0 0
    %891 = vmatprep.subr.bf16.mxu0 0
    %892 = vmatpush1.bf16.msra.mxu0 0
    %893 = vmatprep.subr.bf16.mxu0 0
    %894 = vmatpush1.bf16.msra.mxu0 0
    %895 = vmatprep.subr.bf16.mxu0 0
    %896 = vmatpush1.bf16.msra.mxu0 0
    %897 = vmatprep.mubr.bf16.mxu0 0
    %898 = vmatmul.mubr.bf16.gmra.mrb[0].mxu0 %v800
    %v899 = vpop.f32.mrb[0].mxu0
    %v900 = vadd.f32 0.0, %v899
    %v901 = vpop.f32.mrb[0].mxu0
    %v902 = vpop.f32.mrb[0].mxu0
    %v903 = vadd.f32 0.0, %v902
    %v904 = vpop.f32.mrb[0].mxu0
    %905 = vdwg.mxu0
    %v906 = vmax.f32 %v900, 0.0
    %v907 = vmax.f32 %v903, 0.0
    %v908 = vpack.c.bf16 %v907, %v906
    %v909 = vld [vmem:[#allocation8] sm:$0xf]
    %v910 = vld [vmem:[#allocation8 + $0x4] sm:$0xf]
    %v911 = vld [vmem:[#allocation8 + $0x8] sm:$0xf]
    %v912 = vld [vmem:[#allocation8 + $0xc] sm:$0xf]
    %v913 = vld [vmem:[#allocation8 + $0x10] sm:$0xf]
    %v914 = vld [vmem:[#allocation8 + $0x14] sm:$0xf]
    %v915 = vld [vmem:[#allocation8 + $0x18] sm:$0xf]
    %v916 = vld [vmem:[#allocation8 + $0x1c] sm:$0xf]
    %v917 = vld [vmem:[#allocation8 + $0x20] sm:$0xf]
    %v918 = vld [vmem:[#allocation8 + $0x24] sm:$0xf]
    %v919 = vld [vmem:[#allocation8 + $0x28] sm:$0xf]
    %v920 = vld [vmem:[#allocation8 + $0x2c] sm:$0xf]
    %v921 = vld [vmem:[#allocation8 + $0x30] sm:$0xf]
    %v922 = vld [vmem:[#allocation8 + $0x34] sm:$0xf]
    %v923 = vld [vmem:[#allocation8 + $0x38] sm:$0xf]
    %v924 = vld [vmem:[#allocation8 + $0x3c] sm:$0xf]
    %v941 = vunpack.c.l.b16 %v909
    %v942 = vunpack.c.l.b16 %v910
    %v943 = vunpack.c.l.b16 %v911
    %v944 = vunpack.c.l.b16 %v912
    %v945 = vunpack.c.l.b16 %v913
    %v946 = vunpack.c.l.b16 %v914
    %v947 = vunpack.c.l.b16 %v915
    %v948 = vunpack.c.l.b16 %v916
    %v949 = vunpack.c.l.b16 %v917
    %v950 = vunpack.c.l.b16 %v918
    %v951 = vunpack.c.l.b16 %v919
    %v952 = vunpack.c.l.b16 %v920
    %v953 = vunpack.c.l.b16 %v921
    %v954 = vunpack.c.l.b16 %v922
    %v955 = vunpack.c.l.b16 %v923
    %v956 = vunpack.c.l.b16 %v924
    %v957 = vpack.c.b16 %v942, %v941
    %v958 = vpack.c.b16 %v944, %v943
    %v959 = vpack.c.b16 %v946, %v945
    %v960 = vpack.c.b16 %v948, %v947
    %v961 = vpack.c.b16 %v950, %v949
    %v962 = vpack.c.b16 %v952, %v951
    %v963 = vpack.c.b16 %v954, %v953
    %v964 = vpack.c.b16 %v956, %v955
    %973 = vmatprep.subr.bf16.mxu0 0
    %974 = vmatpush1.bf16.msra.mxu0 %v957
    %975 = vmatprep.subr.bf16.mxu0 0
    %976 = vmatpush1.bf16.msra.mxu0 %v958
    %977 = vmatprep.subr.bf16.mxu0 0
    %978 = vmatpush1.bf16.msra.mxu0 %v959
    %979 = vmatprep.subr.bf16.mxu0 0
    %980 = vmatpush1.bf16.msra.mxu0 %v960
    %981 = vmatprep.subr.bf16.mxu0 0
    %982 = vmatpush1.bf16.msra.mxu0 %v961
    %983 = vmatprep.subr.bf16.mxu0 0
    %984 = vmatpush1.bf16.msra.mxu0 %v962
    %985 = vmatprep.subr.bf16.mxu0 0
    %986 = vmatpush1.bf16.msra.mxu0 %v963
    %987 = vmatprep.subr.bf16.mxu0 0
    %988 = vmatpush1.bf16.msra.mxu0 %v964
    %989 = vmatprep.subr.bf16.mxu0 0
    %990 = vmatpush1.bf16.msra.mxu0 0
    %991 = vmatprep.subr.bf16.mxu0 0
    %992 = vmatpush1.bf16.msra.mxu0 0
    %993 = vmatprep.subr.bf16.mxu0 0
    %994 = vmatpush1.bf16.msra.mxu0 0
    %995 = vmatprep.subr.bf16.mxu0 0
    %996 = vmatpush1.bf16.msra.mxu0 0
    %997 = vmatprep.subr.bf16.mxu0 0
    %998 = vmatpush1.bf16.msra.mxu0 0
    %999 = vmatprep.subr.bf16.mxu0 0
    %1000 = vmatpush1.bf16.msra.mxu0 0
    %1001 = vmatprep.subr.bf16.mxu0 0
    %1002 = vmatpush1.bf16.msra.mxu0 0
    %1003 = vmatprep.subr.bf16.mxu0 0
    %1004 = vmatpush1.bf16.msra.mxu0 0
    %1005 = vmatprep.mubr.bf16.mxu0 0
    %1006 = vmatmul.mubr.bf16.gmra.mrb[0].mxu0 %v908
    %v1007 = vpop.f32.mrb[0].mxu0
    %v1008 = vadd.f32 0.0, %v1007
    %v1009 = vpop.f32.mrb[0].mxu0
    %v1010 = vpop.f32.mrb[0].mxu0
    %v1011 = vadd.f32 0.0, %v1010
    %v1012 = vpop.f32.mrb[0].mxu0
    %1013 = vdwg.mxu0
    %1014 = vst [vmem:[#allocation10] sm:$0xff] %v1008
    %1015 = vst [vmem:[#allocation10 + $0x8] sm:$0xff] %v1011
    // Predicated region
    $region34: #{tpu_custom_call.1} parent=1 // pred_check
      _
    $region35: #{tpu_custom_call.1} parent=1 // pred_check_branch
      %1017 = sbr.rel (0) target = $region37
    $region36: #{tpu_custom_call.1} parent=1 // pred_region
      %s1019 = ssub.s32 256, 256
      %1020 = vsyncadd [#allocation4], %s1019
      %s1021 = sshll.u32 [#allocation10], 4
      %s1022 = int_to_ptr.vmem [resolvable:$true] %s1021
      %1027 = dma.vmem_to_hbm [thread:$0]  %s1022, 256, %s4, [#allocation4], 128, 128, 8
    $region37: #{tpu_custom_call.1} parent=1 // pred_fallthru
      _
    // Predicated region
    $region38: #{tpu_custom_call.1} parent=1 // pred_check
      _
    $region39: #{tpu_custom_call.1} parent=1 // pred_check_branch
      %1029 = sbr.rel (0) target = $region41
    $region40: #{tpu_custom_call.1} parent=1 // pred_region
      %1030 = dma.done [#allocation4], 256
    $region41: #{tpu_custom_call.1} parent=1 // pred_fallthru
      _
    %1031 = vsyncpa [#allocation3], 1
    %1032 = vsyncpa [#allocation6], 1
    %1033 = vsyncpa [#allocation9], 1
    %1034 = vsyncpa [#allocation4], 1

</llo_original>
